<compile_context>
chip_gen: v5e
topology: v5e:2x2
jax: 0.10.0
libtpu: 0.0.40
codegen_flags: <defaults>
</compile_context>

<pallas_src>
import jax
import jax.numpy as jnp
from jax import lax
from jax.experimental import pallas as pl
from jax.experimental.pallas import tpu as pltpu


# ----------------------------------------------------------------------------
# Single fused kernel: batched masked LSTM recurrence + classifier head
# ----------------------------------------------------------------------------
def _lstm_main_kernel(len1_ref, len2_ref, x1_ref, x2_ref,
                      wl_ref, wh_ref, cst_ref, out_ref):
    B = len1_ref.shape[0]
    BB = 2 * B
    TB, E = x1_ref.shape
    T = TB // B
    H = wl_ref.shape[0] - E          # rows: E of W_ih^T then H of W_hh^T
    G = 4 * H
    FCP = wh_ref.shape[1]            # lane-padded fc dim (=128)

    # ---- hoisted loop-invariant quantities ---------------------------------
    w_ih = wl_ref[0:E, :]                                   # (E, 4H) bf16
    w_hh = wl_ref[E:E + H, :]                               # (H, 4H) bf16
    b_lstm = cst_ref[0:1, 0:G]                              # (1, 4H)
    b1 = cst_ref[1:2, 0:FCP]                                # (1, FCP)
    b2 = cst_ref[2:3, :]                                    # (1, OUTP)

    # sigmoid(x) = 0.5*(1 + tanh(x/2)): pre-scale + post fix-up masks so ONE
    # vreg-wide tanh covers all four gates (i,f,o sigmoid lanes; g tanh lanes).
    lane = lax.broadcasted_iota(jnp.int32, (BB, G), 1)
    is_g = (lane >= 2 * H) & (lane < 3 * H)
    pre = jnp.where(is_g, 1.0, 0.5)                         # also the post-mul
    posta = jnp.where(is_g, 0.0, 0.5)

    # per-row sequence lengths -> (BB, H) vector (hoisted, off recurrence path)
    row = lax.broadcasted_iota(jnp.int32, (BB, H), 0)
    len_vec = jnp.zeros((BB, H), jnp.int32)
    for b in range(B):
        len_vec = jnp.where(row == b, len1_ref[b], len_vec)
        len_vec = jnp.where(row == B + b, len2_ref[b], len_vec)

    # ---- input projection for ALL timesteps (hoisted MXU matmuls, bf16) ----
    xp1 = jnp.dot(x1_ref[...].astype(jnp.bfloat16), w_ih,
                  preferred_element_type=jnp.float32) + b_lstm      # (T*B, 4H)
    xp2 = jnp.dot(x2_ref[...].astype(jnp.bfloat16), w_ih,
                  preferred_element_type=jnp.float32) + b_lstm      # (T*B, 4H)

    # ---- masked LSTM recurrence (fully unrolled; T is small & static) ------
    # TODO(synk): if T grows, switch to lax.fori_loop(..., unroll=True) to
    # bound live ranges; and hold W_hh resident in the MXU across steps via
    # pltpu.matmul_push_rhs / matmul_acc_lhs / matmul_pop.
    h = jnp.zeros((BB, H), jnp.float32)
    c = jnp.zeros((BB, H), jnp.float32)
    for t in range(T):
        # xp_t does not depend on h/c -> scheduled off the serial chain.
        xp_t = jnp.concatenate(
            [xp1[t * B:(t + 1) * B, :], xp2[t * B:(t + 1) * B, :]], axis=0)
        gates = xp_t + jnp.dot(h.astype(jnp.bfloat16), w_hh,
                               preferred_element_type=jnp.float32)   # (BB, 4H)

        # single EUP pass for all four gates
        tnh = jnp.tanh(gates * pre)
        act = tnh * pre + posta              # sigmoid lanes / tanh(g) lanes

        # TODO(synk): the f/g/o lane extractions are XLU rotates on the serial
        # chain; a replicated-state / pltpu.roll formulation could trim them.
        i_g = act[:, 0 * H:1 * H]
        f_g = act[:, 1 * H:2 * H]
        g_g = act[:, 2 * H:3 * H]
        o_g = act[:, 3 * H:4 * H]

        c_new = f_g * c + i_g * g_g
        h_new = o_g * jnp.tanh(c_new)

        # packed-sequence semantics: freeze state once t >= sent_len[b]
        valid = t < len_vec
        c = jnp.where(valid, c_new, c)
        h = jnp.where(valid, h_new, h)

    # ---- fused classifier head (computed for all BB rows; rows >= B are a
    #      harmless (v,u) ordering so the final store is a full dense vreg) ---
    u_f = h                                                  # rows 0..B-1 = u
    v_f = jnp.concatenate([h[B:BB, :], h[0:B, :]], axis=0)   # rows 0..B-1 = v
    d_f = jnp.abs(u_f - v_f)
    p_f = u_f * v_f

    w1 = wh_ref[0:G, :]                                      # (4H, FCP) f32
    w2 = wh_ref[G:G + FCP, :]                                # (FCP, OUTP) f32
    h1 = (jnp.dot(u_f, w1[0 * H:1 * H, :], preferred_element_type=jnp.float32)
          + jnp.dot(v_f, w1[1 * H:2 * H, :], preferred_element_type=jnp.float32)
          + jnp.dot(d_f, w1[2 * H:3 * H, :], preferred_element_type=jnp.float32)
          + jnp.dot(p_f, w1[3 * H:4 * H, :], preferred_element_type=jnp.float32)
          + b1)                                              # (BB, FCP)
    out = jnp.dot(h1, w2, preferred_element_type=jnp.float32) + b2  # (BB, OUTP)
    out_ref[...] = out.astype(out_ref.dtype)                 # unmasked dense vst


# ----------------------------------------------------------------------------
# Parameter packing (done once, outside jit -> zero runtime cost)
# ----------------------------------------------------------------------------
def pack_params(w_ih, w_hh, b_ih, b_hh, w1, b1, w2, b2, *, pad=128):
    E = w_ih.shape[1]
    H = w_hh.shape[1]
    G = 4 * H
    FC, NC = w1.shape[0], w2.shape[0]
    assert G <= pad and FC <= pad and NC <= pad
    # LSTM weights: one bf16 array [W_ih^T ; W_hh^T]  -> (E+H, 4H)
    w_lstm = jnp.concatenate([w_ih.T, w_hh.T], axis=0).astype(jnp.bfloat16)
    # Classifier weights: lane-padded, stacked  -> (4H + pad, pad), f32
    w1p = jnp.zeros((G, pad), jnp.float32).at[:, :FC].set(w1.T)
    w2p = jnp.zeros((pad, pad), jnp.float32).at[:FC, :NC].set(w2.T)
    w_head = jnp.concatenate([w1p, w2p], axis=0)
    # Biases consolidated into one (8, pad) array (rows: b_lstm, b1, b2)
    consts = jnp.zeros((8, pad), jnp.float32)
    consts = consts.at[0, :G].set(b_ih + b_hh)
    consts = consts.at[1, :FC].set(b1)
    consts = consts.at[2, :NC].set(b2)
    return {"w_lstm": w_lstm, "w_head": w_head, "consts": consts,
            "dims": (E, H, FC, NC)}


# ----------------------------------------------------------------------------
# Wrapper: reshapes only (free), everything else inside the kernel
# ----------------------------------------------------------------------------
def lstm_main_forward(params, s1, len1, s2, len2):
    """s1/s2: (T, B, E) f32 time-major, len1/len2: (B,) int.  Returns (B, n_classes)."""
    T, B, E = s1.shape
    BB = 2 * B
    NC = params["dims"][3]
    x1 = s1.reshape(T * B, E)        # contiguous reshape: no copy
    x2 = s2.reshape(T * B, E)

    # TODO(synk): for scaled-up H/B add a batch grid axis with
    # dimension_semantics=("parallel",) (second TC on v7x) and re-derive tile
    # sizes / vmem_limit_bytes against 64 MiB VMEM on v7x.
    out_pad = pl.pallas_call(
        _lstm_main_kernel,
        out_shape=jax.ShapeDtypeStruct((BB, 128), jnp.float32),
        in_specs=[
            pl.BlockSpec(memory_space=pltpu.MemorySpace.SMEM),   # len1
            pl.BlockSpec(memory_space=pltpu.MemorySpace.SMEM),   # len2
            pl.BlockSpec(memory_space=pltpu.MemorySpace.VMEM),   # x1
            pl.BlockSpec(memory_space=pltpu.MemorySpace.VMEM),   # x2
            pl.BlockSpec(memory_space=pltpu.MemorySpace.VMEM),   # w_lstm (bf16)
            pl.BlockSpec(memory_space=pltpu.MemorySpace.VMEM),   # w_head
            pl.BlockSpec(memory_space=pltpu.MemorySpace.VMEM),   # consts
        ],
        out_specs=pl.BlockSpec(memory_space=pltpu.MemorySpace.VMEM),
    )(len1.astype(jnp.int32), len2.astype(jnp.int32), x1, x2,
      params["w_lstm"], params["w_head"], params["consts"])
    return out_pad[:B, :NC]


# ----------------------------------------------------------------------------
# Pure-JAX f32 reference (mirrors PyTorch semantics) for the correctness check
# ----------------------------------------------------------------------------
def _lstm_ref(sent, sent_len, w_ih_t, w_hh_t, bias):
    T, B, E = sent.shape
    H = w_hh_t.shape[0]
    h = jnp.zeros((B, H), jnp.float32)
    c = jnp.zeros((B, H), jnp.float32)
    hi = lax.Precision.HIGHEST
    for t in range(T):
        gates = (jnp.dot(sent[t], w_ih_t, precision=hi)
                 + jnp.dot(h, w_hh_t, precision=hi) + bias)
        i_g = jax.nn.sigmoid(gates[:, 0 * H:1 * H])
        f_g = jax.nn.sigmoid(gates[:, 1 * H:2 * H])
        g_g = jnp.tanh(gates[:, 2 * H:3 * H])
        o_g = jax.nn.sigmoid(gates[:, 3 * H:4 * H])
        c_new = f_g * c + i_g * g_g
        h_new = o_g * jnp.tanh(c_new)
        mask = (t < sent_len)[:, None]
        h = jnp.where(mask, h_new, h)
        c = jnp.where(mask, c_new, c)
    return h


def _forward_ref(p, s1, len1, s2, len2):
    hi = lax.Precision.HIGHEST
    u = _lstm_ref(s1, len1, p["w_ih_t"], p["w_hh_t"], p["b_lstm"])
    v = _lstm_ref(s2, len2, p["w_ih_t"], p["w_hh_t"], p["b_lstm"])
    feats = jnp.concatenate([u, v, jnp.abs(u - v), u * v], axis=1)
    h1 = jnp.dot(feats, p["w1_t"], precision=hi) + p["b1"]
    return jnp.dot(h1, p["w2_t"], precision=hi) + p["b2"]


# ----------------------------------------------------------------------------
# Main
# ----------------------------------------------------------------------------
if __name__ == "__main__":
    # config: model_name='lstm', b_size=B, emb_dim=E, lstm_dim=H, fc_dim, n_classes
    T, B, E, H = 8, 4, 32, 32
    FC, NC = 64, 3

    key = jax.random.PRNGKey(0)
    ks = jax.random.split(key, 12)

    scale_lstm = 1.0 / jnp.sqrt(H)
    scale_fc1 = 1.0 / jnp.sqrt(4 * H)
    scale_fc2 = 1.0 / jnp.sqrt(FC)

    # PyTorch shapes: weight_ih (4H, E), weight_hh (4H, H), bias_ih/hh (4H,)
    w_ih = jax.random.uniform(ks[0], (4 * H, E), jnp.float32, -scale_lstm, scale_lstm)
    w_hh = jax.random.uniform(ks[1], (4 * H, H), jnp.float32, -scale_lstm, scale_lstm)
    b_ih = jax.random.uniform(ks[2], (4 * H,), jnp.float32, -scale_lstm, scale_lstm)
    b_hh = jax.random.uniform(ks[3], (4 * H,), jnp.float32, -scale_lstm, scale_lstm)
    # Classifier: Linear(4H, FC), Linear(FC, NC)
    w1 = jax.random.uniform(ks[4], (FC, 4 * H), jnp.float32, -scale_fc1, scale_fc1)
    b1 = jax.random.uniform(ks[5], (FC,), jnp.float32, -scale_fc1, scale_fc1)
    w2 = jax.random.uniform(ks[6], (NC, FC), jnp.float32, -scale_fc2, scale_fc2)
    b2 = jax.random.uniform(ks[7], (NC,), jnp.float32, -scale_fc2, scale_fc2)

    kparams = pack_params(w_ih, w_hh, b_ih, b_hh, w1, b1, w2, b2)
    ref_params = {
        "w_ih_t": w_ih.T, "w_hh_t": w_hh.T, "b_lstm": (b_ih + b_hh).reshape(1, 4 * H),
        "w1_t": w1.T, "b1": b1.reshape(1, FC), "w2_t": w2.T, "b2": b2.reshape(1, NC),
    }

    # Inputs: two (sent, sent_len) tuples; sent is (T, B, E) time-major.
    s1 = jax.random.normal(ks[8], (T, B, E), jnp.float32)
    s2 = jax.random.normal(ks[9], (T, B, E), jnp.float32)
    len1 = jax.random.randint(ks[10], (B,), 1, T + 1).astype(jnp.int32)
    len2 = jax.random.randint(ks[11], (B,), 1, T + 1).astype(jnp.int32)

    fwd = jax.jit(lambda a, la, b, lb: lstm_main_forward(kparams, a, la, b, lb))
    out = jax.block_until_ready(fwd(s1, len1, s2, len2))
    ref = _forward_ref(ref_params, s1, len1, s2, len2)

    assert out.shape == (B, NC), out.shape
    # bf16 MXU operands in the recurrence -> compare against the f32 reference
    # with a bf16-appropriate tolerance.
    assert jnp.allclose(out, ref, rtol=2e-2, atol=2e-2), (
        f"mismatch: max abs err {jnp.max(jnp.abs(out - ref))}"
    )
    print("KERNEL_OK")
</pallas_src>

<mosaic_0001>
module attributes {stable_mosaic.version = 11 : i64} {
  func.func @_lstm_main_kernel(%arg0: memref<4xi32, #tpu.memory_space<smem>>, %arg1: memref<4xi32, #tpu.memory_space<smem>>, %arg2: memref<32x32xf32, #tpu.memory_space<vmem>>, %arg3: memref<32x32xf32, #tpu.memory_space<vmem>>, %arg4: memref<64x128xbf16, #tpu.memory_space<vmem>>, %arg5: memref<256x128xf32, #tpu.memory_space<vmem>>, %arg6: memref<8x128xf32, #tpu.memory_space<vmem>>, %arg7: memref<8x128xf32, #tpu.memory_space<vmem>>) attributes {dimension_semantics = [], scalar_prefetch = 0 : i64, scratch_operands = 0 : i64, tpu.core_type = #tpu.core_type<tc>} {
    %c0 = arith.constant 0 : index
    %c0_0 = arith.constant 0 : index
    %0 = vector.load %arg4[%c0, %c0_0] : memref<64x128xbf16, #tpu.memory_space<vmem>>, vector<32x128xbf16>
    %c32 = arith.constant 32 : index
    %c0_1 = arith.constant 0 : index
    %1 = vector.load %arg4[%c32, %c0_1] : memref<64x128xbf16, #tpu.memory_space<vmem>>, vector<32x128xbf16>
    %c0_2 = arith.constant 0 : index
    %c0_3 = arith.constant 0 : index
    %2 = vector.load %arg6[%c0_2, %c0_3] : memref<8x128xf32, #tpu.memory_space<vmem>>, vector<1x128xf32>
    %c1 = arith.constant 1 : index
    %c0_4 = arith.constant 0 : index
    %3 = vector.load %arg6[%c1, %c0_4] : memref<8x128xf32, #tpu.memory_space<vmem>>, vector<1x128xf32>
    %c2 = arith.constant 2 : index
    %c0_5 = arith.constant 0 : index
    %4 = vector.load %arg6[%c2, %c0_5] : memref<8x128xf32, #tpu.memory_space<vmem>>, vector<1x128xf32>
    %5 = tpu.iota {dimensions = array<i32: 1>} : vector<8x128xi32>
    %c64_i32 = arith.constant 64 : i32
    %6 = vector.broadcast %c64_i32 : i32 to vector<8x128xi32>
    %7 = arith.cmpi sge, %5, %6 : vector<8x128xi32>
    %c96_i32 = arith.constant 96 : i32
    %8 = vector.broadcast %c96_i32 : i32 to vector<8x128xi32>
    %9 = arith.cmpi slt, %5, %8 : vector<8x128xi32>
    %10 = arith.andi %7, %9 : vector<8x128xi1>
    %cst = arith.constant 1.000000e+00 : f32
    %cst_6 = arith.constant 5.000000e-01 : f32
    %11 = vector.broadcast %cst : f32 to vector<8x128xf32>
    %12 = vector.broadcast %cst_6 : f32 to vector<8x128xf32>
    %13 = arith.select %10, %11, %12 : vector<8x128xi1>, vector<8x128xf32>
    %cst_7 = arith.constant 0.000000e+00 : f32
    %cst_8 = arith.constant 5.000000e-01 : f32
    %14 = vector.broadcast %cst_7 : f32 to vector<8x128xf32>
    %15 = vector.broadcast %cst_8 : f32 to vector<8x128xf32>
    %16 = arith.select %10, %14, %15 : vector<8x128xi1>, vector<8x128xf32>
    %17 = tpu.iota {dimensions = array<i32: 0>} : vector<8x32xi32>
    %c0_i32 = arith.constant 0 : i32
    %18 = vector.broadcast %c0_i32 : i32 to vector<8x32xi32>
    %c0_i32_9 = arith.constant 0 : i32
    %19 = vector.broadcast %c0_i32_9 : i32 to vector<8x32xi32>
    %20 = arith.cmpi eq, %17, %19 : vector<8x32xi32>
    %c0_10 = arith.constant 0 : index
    %21 = memref.load %arg0[%c0_10] : memref<4xi32, #tpu.memory_space<smem>>
    %22 = vector.broadcast %21 : i32 to vector<8x32xi32>
    %23 = arith.select %20, %22, %18 : vector<8x32xi1>, vector<8x32xi32>
    %c4_i32 = arith.constant 4 : i32
    %24 = vector.broadcast %c4_i32 : i32 to vector<8x32xi32>
    %25 = arith.cmpi eq, %17, %24 : vector<8x32xi32>
    %c0_11 = arith.constant 0 : index
    %26 = memref.load %arg1[%c0_11] : memref<4xi32, #tpu.memory_space<smem>>
    %27 = vector.broadcast %26 : i32 to vector<8x32xi32>
    %28 = arith.select %25, %27, %23 : vector<8x32xi1>, vector<8x32xi32>
    %c1_i32 = arith.constant 1 : i32
    %29 = vector.broadcast %c1_i32 : i32 to vector<8x32xi32>
    %30 = arith.cmpi eq, %17, %29 : vector<8x32xi32>
    %c1_12 = arith.constant 1 : index
    %31 = memref.load %arg0[%c1_12] : memref<4xi32, #tpu.memory_space<smem>>
    %32 = vector.broadcast %31 : i32 to vector<8x32xi32>
    %33 = arith.select %30, %32, %28 : vector<8x32xi1>, vector<8x32xi32>
    %c5_i32 = arith.constant 5 : i32
    %34 = vector.broadcast %c5_i32 : i32 to vector<8x32xi32>
    %35 = arith.cmpi eq, %17, %34 : vector<8x32xi32>
    %c1_13 = arith.constant 1 : index
    %36 = memref.load %arg1[%c1_13] : memref<4xi32, #tpu.memory_space<smem>>
    %37 = vector.broadcast %36 : i32 to vector<8x32xi32>
    %38 = arith.select %35, %37, %33 : vector<8x32xi1>, vector<8x32xi32>
    %c2_i32 = arith.constant 2 : i32
    %39 = vector.broadcast %c2_i32 : i32 to vector<8x32xi32>
    %40 = arith.cmpi eq, %17, %39 : vector<8x32xi32>
    %c2_14 = arith.constant 2 : index
    %41 = memref.load %arg0[%c2_14] : memref<4xi32, #tpu.memory_space<smem>>
    %42 = vector.broadcast %41 : i32 to vector<8x32xi32>
    %43 = arith.select %40, %42, %38 : vector<8x32xi1>, vector<8x32xi32>
    %c6_i32 = arith.constant 6 : i32
    %44 = vector.broadcast %c6_i32 : i32 to vector<8x32xi32>
    %45 = arith.cmpi eq, %17, %44 : vector<8x32xi32>
    %c2_15 = arith.constant 2 : index
    %46 = memref.load %arg1[%c2_15] : memref<4xi32, #tpu.memory_space<smem>>
    %47 = vector.broadcast %46 : i32 to vector<8x32xi32>
    %48 = arith.select %45, %47, %43 : vector<8x32xi1>, vector<8x32xi32>
    %c3_i32 = arith.constant 3 : i32
    %49 = vector.broadcast %c3_i32 : i32 to vector<8x32xi32>
    %50 = arith.cmpi eq, %17, %49 : vector<8x32xi32>
    %c3 = arith.constant 3 : index
    %51 = memref.load %arg0[%c3] : memref<4xi32, #tpu.memory_space<smem>>
    %52 = vector.broadcast %51 : i32 to vector<8x32xi32>
    %53 = arith.select %50, %52, %48 : vector<8x32xi1>, vector<8x32xi32>
    %c7_i32 = arith.constant 7 : i32
    %54 = vector.broadcast %c7_i32 : i32 to vector<8x32xi32>
    %55 = arith.cmpi eq, %17, %54 : vector<8x32xi32>
    %c3_16 = arith.constant 3 : index
    %56 = memref.load %arg1[%c3_16] : memref<4xi32, #tpu.memory_space<smem>>
    %57 = vector.broadcast %56 : i32 to vector<8x32xi32>
    %58 = arith.select %55, %57, %53 : vector<8x32xi1>, vector<8x32xi32>
    %c0_17 = arith.constant 0 : index
    %c0_18 = arith.constant 0 : index
    %59 = vector.load %arg2[%c0_17, %c0_18] : memref<32x32xf32, #tpu.memory_space<vmem>>, vector<32x32xf32>
    %60 = arith.truncf %59 : vector<32x32xf32> to vector<32x32xbf16>
    %cst_19 = arith.constant dense<0.000000e+00> : vector<32x128xf32>
    %61 = tpu.matmul %60, %0, %cst_19 {dimension_numbers = #tpu.dot_dimension_numbers<[1], [0], [0], [1], [0, 0, 1, 1], [], []>} : vector<32x32xbf16>, vector<32x128xbf16>, vector<32x128xf32> -> vector<32x128xf32>
    %62 = vector.broadcast %2 : vector<1x128xf32> to vector<32x128xf32>
    %63 = arith.addf %61, %62 : vector<32x128xf32>
    %c0_20 = arith.constant 0 : index
    %c0_21 = arith.constant 0 : index
    %64 = vector.load %arg3[%c0_20, %c0_21] : memref<32x32xf32, #tpu.memory_space<vmem>>, vector<32x32xf32>
    %65 = arith.truncf %64 : vector<32x32xf32> to vector<32x32xbf16>
    %cst_22 = arith.constant dense<0.000000e+00> : vector<32x128xf32>
    %66 = tpu.matmul %65, %0, %cst_22 {dimension_numbers = #tpu.dot_dimension_numbers<[1], [0], [0], [1], [0, 0, 1, 1], [], []>} : vector<32x32xbf16>, vector<32x128xbf16>, vector<32x128xf32> -> vector<32x128xf32>
    %67 = vector.broadcast %2 : vector<1x128xf32> to vector<32x128xf32>
    %68 = arith.addf %66, %67 : vector<32x128xf32>
    %cst_23 = arith.constant 0.000000e+00 : f32
    %69 = vector.broadcast %cst_23 : f32 to vector<8x32xf32>
    %cst_24 = arith.constant 0.000000e+00 : f32
    %70 = vector.broadcast %cst_24 : f32 to vector<8x32xf32>
    %71 = vector.extract_strided_slice %63 {offsets = [0, 0], sizes = [4, 128], strides = [1, 1]} : vector<32x128xf32> to vector<4x128xf32>
    %72 = vector.extract_strided_slice %68 {offsets = [0, 0], sizes = [4, 128], strides = [1, 1]} : vector<32x128xf32> to vector<4x128xf32>
    %73 = tpu.concatenate %71, %72 in 0 : vector<4x128xf32>, vector<4x128xf32> -> vector<8x128xf32>
    %74 = arith.truncf %69 : vector<8x32xf32> to vector<8x32xbf16>
    %cst_25 = arith.constant dense<0.000000e+00> : vector<8x128xf32>
    %75 = tpu.matmul %74, %1, %cst_25 {dimension_numbers = #tpu.dot_dimension_numbers<[1], [0], [0], [1], [0, 0, 1, 1], [], []>} : vector<8x32xbf16>, vector<32x128xbf16>, vector<8x128xf32> -> vector<8x128xf32>
    %76 = arith.addf %73, %75 : vector<8x128xf32>
    %77 = arith.mulf %76, %13 : vector<8x128xf32>
    %78 = math.tanh %77 : vector<8x128xf32>
    %79 = arith.mulf %78, %13 : vector<8x128xf32>
    %80 = arith.addf %79, %16 : vector<8x128xf32>
    %81 = vector.extract_strided_slice %80 {offsets = [0, 0], sizes = [8, 32], strides = [1, 1]} : vector<8x128xf32> to vector<8x32xf32>
    %82 = vector.extract_strided_slice %80 {offsets = [0, 32], sizes = [8, 32], strides = [1, 1]} : vector<8x128xf32> to vector<8x32xf32>
    %83 = vector.extract_strided_slice %80 {offsets = [0, 64], sizes = [8, 32], strides = [1, 1]} : vector<8x128xf32> to vector<8x32xf32>
    %84 = vector.extract_strided_slice %80 {offsets = [0, 96], sizes = [8, 32], strides = [1, 1]} : vector<8x128xf32> to vector<8x32xf32>
    %85 = arith.mulf %82, %70 : vector<8x32xf32>
    %86 = arith.mulf %81, %83 : vector<8x32xf32>
    %87 = arith.addf %85, %86 : vector<8x32xf32>
    %88 = math.tanh %87 : vector<8x32xf32>
    %89 = arith.mulf %84, %88 : vector<8x32xf32>
    %c0_i32_26 = arith.constant 0 : i32
    %90 = vector.broadcast %c0_i32_26 : i32 to vector<8x32xi32>
    %91 = arith.cmpi sgt, %58, %90 : vector<8x32xi32>
    %92 = arith.select %91, %87, %70 : vector<8x32xi1>, vector<8x32xf32>
    %93 = arith.select %91, %89, %69 : vector<8x32xi1>, vector<8x32xf32>
    %94 = vector.extract_strided_slice %63 {offsets = [4, 0], sizes = [4, 128], strides = [1, 1]} : vector<32x128xf32> to vector<4x128xf32>
    %95 = vector.extract_strided_slice %68 {offsets = [4, 0], sizes = [4, 128], strides = [1, 1]} : vector<32x128xf32> to vector<4x128xf32>
    %96 = tpu.concatenate %94, %95 in 0 : vector<4x128xf32>, vector<4x128xf32> -> vector<8x128xf32>
    %97 = arith.truncf %93 : vector<8x32xf32> to vector<8x32xbf16>
    %cst_27 = arith.constant dense<0.000000e+00> : vector<8x128xf32>
    %98 = tpu.matmul %97, %1, %cst_27 {dimension_numbers = #tpu.dot_dimension_numbers<[1], [0], [0], [1], [0, 0, 1, 1], [], []>} : vector<8x32xbf16>, vector<32x128xbf16>, vector<8x128xf32> -> vector<8x128xf32>
    %99 = arith.addf %96, %98 : vector<8x128xf32>
    %100 = arith.mulf %99, %13 : vector<8x128xf32>
    %101 = math.tanh %100 : vector<8x128xf32>
    %102 = arith.mulf %101, %13 : vector<8x128xf32>
    %103 = arith.addf %102, %16 : vector<8x128xf32>
    %104 = vector.extract_strided_slice %103 {offsets = [0, 0], sizes = [8, 32], strides = [1, 1]} : vector<8x128xf32> to vector<8x32xf32>
    %105 = vector.extract_strided_slice %103 {offsets = [0, 32], sizes = [8, 32], strides = [1, 1]} : vector<8x128xf32> to vector<8x32xf32>
    %106 = vector.extract_strided_slice %103 {offsets = [0, 64], sizes = [8, 32], strides = [1, 1]} : vector<8x128xf32> to vector<8x32xf32>
    %107 = vector.extract_strided_slice %103 {offsets = [0, 96], sizes = [8, 32], strides = [1, 1]} : vector<8x128xf32> to vector<8x32xf32>
    %108 = arith.mulf %105, %92 : vector<8x32xf32>
    %109 = arith.mulf %104, %106 : vector<8x32xf32>
    %110 = arith.addf %108, %109 : vector<8x32xf32>
    %111 = math.tanh %110 : vector<8x32xf32>
    %112 = arith.mulf %107, %111 : vector<8x32xf32>
    %c1_i32_28 = arith.constant 1 : i32
    %113 = vector.broadcast %c1_i32_28 : i32 to vector<8x32xi32>
    %114 = arith.cmpi sgt, %58, %113 : vector<8x32xi32>
    %115 = arith.select %114, %110, %92 : vector<8x32xi1>, vector<8x32xf32>
    %116 = arith.select %114, %112, %93 : vector<8x32xi1>, vector<8x32xf32>
    %117 = vector.extract_strided_slice %63 {offsets = [8, 0], sizes = [4, 128], strides = [1, 1]} : vector<32x128xf32> to vector<4x128xf32>
    %118 = vector.extract_strided_slice %68 {offsets = [8, 0], sizes = [4, 128], strides = [1, 1]} : vector<32x128xf32> to vector<4x128xf32>
    %119 = tpu.concatenate %117, %118 in 0 : vector<4x128xf32>, vector<4x128xf32> -> vector<8x128xf32>
    %120 = arith.truncf %116 : vector<8x32xf32> to vector<8x32xbf16>
    %cst_29 = arith.constant dense<0.000000e+00> : vector<8x128xf32>
    %121 = tpu.matmul %120, %1, %cst_29 {dimension_numbers = #tpu.dot_dimension_numbers<[1], [0], [0], [1], [0, 0, 1, 1], [], []>} : vector<8x32xbf16>, vector<32x128xbf16>, vector<8x128xf32> -> vector<8x128xf32>
    %122 = arith.addf %119, %121 : vector<8x128xf32>
    %123 = arith.mulf %122, %13 : vector<8x128xf32>
    %124 = math.tanh %123 : vector<8x128xf32>
    %125 = arith.mulf %124, %13 : vector<8x128xf32>
    %126 = arith.addf %125, %16 : vector<8x128xf32>
    %127 = vector.extract_strided_slice %126 {offsets = [0, 0], sizes = [8, 32], strides = [1, 1]} : vector<8x128xf32> to vector<8x32xf32>
    %128 = vector.extract_strided_slice %126 {offsets = [0, 32], sizes = [8, 32], strides = [1, 1]} : vector<8x128xf32> to vector<8x32xf32>
    %129 = vector.extract_strided_slice %126 {offsets = [0, 64], sizes = [8, 32], strides = [1, 1]} : vector<8x128xf32> to vector<8x32xf32>
    %130 = vector.extract_strided_slice %126 {offsets = [0, 96], sizes = [8, 32], strides = [1, 1]} : vector<8x128xf32> to vector<8x32xf32>
    %131 = arith.mulf %128, %115 : vector<8x32xf32>
    %132 = arith.mulf %127, %129 : vector<8x32xf32>
    %133 = arith.addf %131, %132 : vector<8x32xf32>
    %134 = math.tanh %133 : vector<8x32xf32>
    %135 = arith.mulf %130, %134 : vector<8x32xf32>
    %c2_i32_30 = arith.constant 2 : i32
    %136 = vector.broadcast %c2_i32_30 : i32 to vector<8x32xi32>
    %137 = arith.cmpi sgt, %58, %136 : vector<8x32xi32>
    %138 = arith.select %137, %133, %115 : vector<8x32xi1>, vector<8x32xf32>
    %139 = arith.select %137, %135, %116 : vector<8x32xi1>, vector<8x32xf32>
    %140 = vector.extract_strided_slice %63 {offsets = [12, 0], sizes = [4, 128], strides = [1, 1]} : vector<32x128xf32> to vector<4x128xf32>
    %141 = vector.extract_strided_slice %68 {offsets = [12, 0], sizes = [4, 128], strides = [1, 1]} : vector<32x128xf32> to vector<4x128xf32>
    %142 = tpu.concatenate %140, %141 in 0 : vector<4x128xf32>, vector<4x128xf32> -> vector<8x128xf32>
    %143 = arith.truncf %139 : vector<8x32xf32> to vector<8x32xbf16>
    %cst_31 = arith.constant dense<0.000000e+00> : vector<8x128xf32>
    %144 = tpu.matmul %143, %1, %cst_31 {dimension_numbers = #tpu.dot_dimension_numbers<[1], [0], [0], [1], [0, 0, 1, 1], [], []>} : vector<8x32xbf16>, vector<32x128xbf16>, vector<8x128xf32> -> vector<8x128xf32>
    %145 = arith.addf %142, %144 : vector<8x128xf32>
    %146 = arith.mulf %145, %13 : vector<8x128xf32>
    %147 = math.tanh %146 : vector<8x128xf32>
    %148 = arith.mulf %147, %13 : vector<8x128xf32>
    %149 = arith.addf %148, %16 : vector<8x128xf32>
    %150 = vector.extract_strided_slice %149 {offsets = [0, 0], sizes = [8, 32], strides = [1, 1]} : vector<8x128xf32> to vector<8x32xf32>
    %151 = vector.extract_strided_slice %149 {offsets = [0, 32], sizes = [8, 32], strides = [1, 1]} : vector<8x128xf32> to vector<8x32xf32>
    %152 = vector.extract_strided_slice %149 {offsets = [0, 64], sizes = [8, 32], strides = [1, 1]} : vector<8x128xf32> to vector<8x32xf32>
    %153 = vector.extract_strided_slice %149 {offsets = [0, 96], sizes = [8, 32], strides = [1, 1]} : vector<8x128xf32> to vector<8x32xf32>
    %154 = arith.mulf %151, %138 : vector<8x32xf32>
    %155 = arith.mulf %150, %152 : vector<8x32xf32>
    %156 = arith.addf %154, %155 : vector<8x32xf32>
    %157 = math.tanh %156 : vector<8x32xf32>
    %158 = arith.mulf %153, %157 : vector<8x32xf32>
    %c3_i32_32 = arith.constant 3 : i32
    %159 = vector.broadcast %c3_i32_32 : i32 to vector<8x32xi32>
    %160 = arith.cmpi sgt, %58, %159 : vector<8x32xi32>
    %161 = arith.select %160, %156, %138 : vector<8x32xi1>, vector<8x32xf32>
    %162 = arith.select %160, %158, %139 : vector<8x32xi1>, vector<8x32xf32>
    %163 = vector.extract_strided_slice %63 {offsets = [16, 0], sizes = [4, 128], strides = [1, 1]} : vector<32x128xf32> to vector<4x128xf32>
    %164 = vector.extract_strided_slice %68 {offsets = [16, 0], sizes = [4, 128], strides = [1, 1]} : vector<32x128xf32> to vector<4x128xf32>
    %165 = tpu.concatenate %163, %164 in 0 : vector<4x128xf32>, vector<4x128xf32> -> vector<8x128xf32>
    %166 = arith.truncf %162 : vector<8x32xf32> to vector<8x32xbf16>
    %cst_33 = arith.constant dense<0.000000e+00> : vector<8x128xf32>
    %167 = tpu.matmul %166, %1, %cst_33 {dimension_numbers = #tpu.dot_dimension_numbers<[1], [0], [0], [1], [0, 0, 1, 1], [], []>} : vector<8x32xbf16>, vector<32x128xbf16>, vector<8x128xf32> -> vector<8x128xf32>
    %168 = arith.addf %165, %167 : vector<8x128xf32>
    %169 = arith.mulf %168, %13 : vector<8x128xf32>
    %170 = math.tanh %169 : vector<8x128xf32>
    %171 = arith.mulf %170, %13 : vector<8x128xf32>
    %172 = arith.addf %171, %16 : vector<8x128xf32>
    %173 = vector.extract_strided_slice %172 {offsets = [0, 0], sizes = [8, 32], strides = [1, 1]} : vector<8x128xf32> to vector<8x32xf32>
    %174 = vector.extract_strided_slice %172 {offsets = [0, 32], sizes = [8, 32], strides = [1, 1]} : vector<8x128xf32> to vector<8x32xf32>
    %175 = vector.extract_strided_slice %172 {offsets = [0, 64], sizes = [8, 32], strides = [1, 1]} : vector<8x128xf32> to vector<8x32xf32>
    %176 = vector.extract_strided_slice %172 {offsets = [0, 96], sizes = [8, 32], strides = [1, 1]} : vector<8x128xf32> to vector<8x32xf32>
    %177 = arith.mulf %174, %161 : vector<8x32xf32>
    %178 = arith.mulf %173, %175 : vector<8x32xf32>
    %179 = arith.addf %177, %178 : vector<8x32xf32>
    %180 = math.tanh %179 : vector<8x32xf32>
    %181 = arith.mulf %176, %180 : vector<8x32xf32>
    %c4_i32_34 = arith.constant 4 : i32
    %182 = vector.broadcast %c4_i32_34 : i32 to vector<8x32xi32>
    %183 = arith.cmpi sgt, %58, %182 : vector<8x32xi32>
    %184 = arith.select %183, %179, %161 : vector<8x32xi1>, vector<8x32xf32>
    %185 = arith.select %183, %181, %162 : vector<8x32xi1>, vector<8x32xf32>
    %186 = vector.extract_strided_slice %63 {offsets = [20, 0], sizes = [4, 128], strides = [1, 1]} : vector<32x128xf32> to vector<4x128xf32>
    %187 = vector.extract_strided_slice %68 {offsets = [20, 0], sizes = [4, 128], strides = [1, 1]} : vector<32x128xf32> to vector<4x128xf32>
    %188 = tpu.concatenate %186, %187 in 0 : vector<4x128xf32>, vector<4x128xf32> -> vector<8x128xf32>
    %189 = arith.truncf %185 : vector<8x32xf32> to vector<8x32xbf16>
    %cst_35 = arith.constant dense<0.000000e+00> : vector<8x128xf32>
    %190 = tpu.matmul %189, %1, %cst_35 {dimension_numbers = #tpu.dot_dimension_numbers<[1], [0], [0], [1], [0, 0, 1, 1], [], []>} : vector<8x32xbf16>, vector<32x128xbf16>, vector<8x128xf32> -> vector<8x128xf32>
    %191 = arith.addf %188, %190 : vector<8x128xf32>
    %192 = arith.mulf %191, %13 : vector<8x128xf32>
    %193 = math.tanh %192 : vector<8x128xf32>
    %194 = arith.mulf %193, %13 : vector<8x128xf32>
    %195 = arith.addf %194, %16 : vector<8x128xf32>
    %196 = vector.extract_strided_slice %195 {offsets = [0, 0], sizes = [8, 32], strides = [1, 1]} : vector<8x128xf32> to vector<8x32xf32>
    %197 = vector.extract_strided_slice %195 {offsets = [0, 32], sizes = [8, 32], strides = [1, 1]} : vector<8x128xf32> to vector<8x32xf32>
    %198 = vector.extract_strided_slice %195 {offsets = [0, 64], sizes = [8, 32], strides = [1, 1]} : vector<8x128xf32> to vector<8x32xf32>
    %199 = vector.extract_strided_slice %195 {offsets = [0, 96], sizes = [8, 32], strides = [1, 1]} : vector<8x128xf32> to vector<8x32xf32>
    %200 = arith.mulf %197, %184 : vector<8x32xf32>
    %201 = arith.mulf %196, %198 : vector<8x32xf32>
    %202 = arith.addf %200, %201 : vector<8x32xf32>
    %203 = math.tanh %202 : vector<8x32xf32>
    %204 = arith.mulf %199, %203 : vector<8x32xf32>
    %c5_i32_36 = arith.constant 5 : i32
    %205 = vector.broadcast %c5_i32_36 : i32 to vector<8x32xi32>
    %206 = arith.cmpi sgt, %58, %205 : vector<8x32xi32>
    %207 = arith.select %206, %202, %184 : vector<8x32xi1>, vector<8x32xf32>
    %208 = arith.select %206, %204, %185 : vector<8x32xi1>, vector<8x32xf32>
    %209 = vector.extract_strided_slice %63 {offsets = [24, 0], sizes = [4, 128], strides = [1, 1]} : vector<32x128xf32> to vector<4x128xf32>
    %210 = vector.extract_strided_slice %68 {offsets = [24, 0], sizes = [4, 128], strides = [1, 1]} : vector<32x128xf32> to vector<4x128xf32>
    %211 = tpu.concatenate %209, %210 in 0 : vector<4x128xf32>, vector<4x128xf32> -> vector<8x128xf32>
    %212 = arith.truncf %208 : vector<8x32xf32> to vector<8x32xbf16>
    %cst_37 = arith.constant dense<0.000000e+00> : vector<8x128xf32>
    %213 = tpu.matmul %212, %1, %cst_37 {dimension_numbers = #tpu.dot_dimension_numbers<[1], [0], [0], [1], [0, 0, 1, 1], [], []>} : vector<8x32xbf16>, vector<32x128xbf16>, vector<8x128xf32> -> vector<8x128xf32>
    %214 = arith.addf %211, %213 : vector<8x128xf32>
    %215 = arith.mulf %214, %13 : vector<8x128xf32>
    %216 = math.tanh %215 : vector<8x128xf32>
    %217 = arith.mulf %216, %13 : vector<8x128xf32>
    %218 = arith.addf %217, %16 : vector<8x128xf32>
    %219 = vector.extract_strided_slice %218 {offsets = [0, 0], sizes = [8, 32], strides = [1, 1]} : vector<8x128xf32> to vector<8x32xf32>
    %220 = vector.extract_strided_slice %218 {offsets = [0, 32], sizes = [8, 32], strides = [1, 1]} : vector<8x128xf32> to vector<8x32xf32>
    %221 = vector.extract_strided_slice %218 {offsets = [0, 64], sizes = [8, 32], strides = [1, 1]} : vector<8x128xf32> to vector<8x32xf32>
    %222 = vector.extract_strided_slice %218 {offsets = [0, 96], sizes = [8, 32], strides = [1, 1]} : vector<8x128xf32> to vector<8x32xf32>
    %223 = arith.mulf %220, %207 : vector<8x32xf32>
    %224 = arith.mulf %219, %221 : vector<8x32xf32>
    %225 = arith.addf %223, %224 : vector<8x32xf32>
    %226 = math.tanh %225 : vector<8x32xf32>
    %227 = arith.mulf %222, %226 : vector<8x32xf32>
    %c6_i32_38 = arith.constant 6 : i32
    %228 = vector.broadcast %c6_i32_38 : i32 to vector<8x32xi32>
    %229 = arith.cmpi sgt, %58, %228 : vector<8x32xi32>
    %230 = arith.select %229, %225, %207 : vector<8x32xi1>, vector<8x32xf32>
    %231 = arith.select %229, %227, %208 : vector<8x32xi1>, vector<8x32xf32>
    %232 = vector.extract_strided_slice %63 {offsets = [28, 0], sizes = [4, 128], strides = [1, 1]} : vector<32x128xf32> to vector<4x128xf32>
    %233 = vector.extract_strided_slice %68 {offsets = [28, 0], sizes = [4, 128], strides = [1, 1]} : vector<32x128xf32> to vector<4x128xf32>
    %234 = tpu.concatenate %232, %233 in 0 : vector<4x128xf32>, vector<4x128xf32> -> vector<8x128xf32>
    %235 = arith.truncf %231 : vector<8x32xf32> to vector<8x32xbf16>
    %cst_39 = arith.constant dense<0.000000e+00> : vector<8x128xf32>
    %236 = tpu.matmul %235, %1, %cst_39 {dimension_numbers = #tpu.dot_dimension_numbers<[1], [0], [0], [1], [0, 0, 1, 1], [], []>} : vector<8x32xbf16>, vector<32x128xbf16>, vector<8x128xf32> -> vector<8x128xf32>
    %237 = arith.addf %234, %236 : vector<8x128xf32>
    %238 = arith.mulf %237, %13 : vector<8x128xf32>
    %239 = math.tanh %238 : vector<8x128xf32>
    %240 = arith.mulf %239, %13 : vector<8x128xf32>
    %241 = arith.addf %240, %16 : vector<8x128xf32>
    %242 = vector.extract_strided_slice %241 {offsets = [0, 0], sizes = [8, 32], strides = [1, 1]} : vector<8x128xf32> to vector<8x32xf32>
    %243 = vector.extract_strided_slice %241 {offsets = [0, 32], sizes = [8, 32], strides = [1, 1]} : vector<8x128xf32> to vector<8x32xf32>
    %244 = vector.extract_strided_slice %241 {offsets = [0, 64], sizes = [8, 32], strides = [1, 1]} : vector<8x128xf32> to vector<8x32xf32>
    %245 = vector.extract_strided_slice %241 {offsets = [0, 96], sizes = [8, 32], strides = [1, 1]} : vector<8x128xf32> to vector<8x32xf32>
    %246 = arith.mulf %243, %230 : vector<8x32xf32>
    %247 = arith.mulf %242, %244 : vector<8x32xf32>
    %248 = arith.addf %246, %247 : vector<8x32xf32>
    %249 = math.tanh %248 : vector<8x32xf32>
    %250 = arith.mulf %245, %249 : vector<8x32xf32>
    %c7_i32_40 = arith.constant 7 : i32
    %251 = vector.broadcast %c7_i32_40 : i32 to vector<8x32xi32>
    %252 = arith.cmpi sgt, %58, %251 : vector<8x32xi32>
    %253 = arith.select %252, %250, %231 : vector<8x32xi1>, vector<8x32xf32>
    %254 = vector.extract_strided_slice %253 {offsets = [4, 0], sizes = [4, 32], strides = [1, 1]} : vector<8x32xf32> to vector<4x32xf32>
    %255 = vector.extract_strided_slice %253 {offsets = [0, 0], sizes = [4, 32], strides = [1, 1]} : vector<8x32xf32> to vector<4x32xf32>
    %256 = tpu.concatenate %254, %255 in 0 : vector<4x32xf32>, vector<4x32xf32> -> vector<8x32xf32>
    %257 = arith.subf %253, %256 : vector<8x32xf32>
    %258 = math.absf %257 : vector<8x32xf32>
    %259 = arith.mulf %253, %256 : vector<8x32xf32>
    %c0_41 = arith.constant 0 : index
    %c0_42 = arith.constant 0 : index
    %260 = vector.load %arg5[%c0_41, %c0_42] : memref<256x128xf32, #tpu.memory_space<vmem>>, vector<128x128xf32>
    %c128 = arith.constant 128 : index
    %c0_43 = arith.constant 0 : index
    %261 = vector.load %arg5[%c128, %c0_43] : memref<256x128xf32, #tpu.memory_space<vmem>>, vector<128x128xf32>
    %262 = vector.extract_strided_slice %260 {offsets = [0, 0], sizes = [32, 128], strides = [1, 1]} : vector<128x128xf32> to vector<32x128xf32>
    %cst_44 = arith.constant dense<0.000000e+00> : vector<8x128xf32>
    %263 = tpu.matmul %253, %262, %cst_44 {dimension_numbers = #tpu.dot_dimension_numbers<[1], [0], [0], [1], [0, 0, 1, 1], [], []>} : vector<8x32xf32>, vector<32x128xf32>, vector<8x128xf32> -> vector<8x128xf32>
    %264 = vector.extract_strided_slice %260 {offsets = [32, 0], sizes = [32, 128], strides = [1, 1]} : vector<128x128xf32> to vector<32x128xf32>
    %cst_45 = arith.constant dense<0.000000e+00> : vector<8x128xf32>
    %265 = tpu.matmul %256, %264, %cst_45 {dimension_numbers = #tpu.dot_dimension_numbers<[1], [0], [0], [1], [0, 0, 1, 1], [], []>} : vector<8x32xf32>, vector<32x128xf32>, vector<8x128xf32> -> vector<8x128xf32>
    %266 = arith.addf %263, %265 : vector<8x128xf32>
    %267 = vector.extract_strided_slice %260 {offsets = [64, 0], sizes = [32, 128], strides = [1, 1]} : vector<128x128xf32> to vector<32x128xf32>
    %cst_46 = arith.constant dense<0.000000e+00> : vector<8x128xf32>
    %268 = tpu.matmul %258, %267, %cst_46 {dimension_numbers = #tpu.dot_dimension_numbers<[1], [0], [0], [1], [0, 0, 1, 1], [], []>} : vector<8x32xf32>, vector<32x128xf32>, vector<8x128xf32> -> vector<8x128xf32>
    %269 = arith.addf %266, %268 : vector<8x128xf32>
    %270 = vector.extract_strided_slice %260 {offsets = [96, 0], sizes = [32, 128], strides = [1, 1]} : vector<128x128xf32> to vector<32x128xf32>
    %cst_47 = arith.constant dense<0.000000e+00> : vector<8x128xf32>
    %271 = tpu.matmul %259, %270, %cst_47 {dimension_numbers = #tpu.dot_dimension_numbers<[1], [0], [0], [1], [0, 0, 1, 1], [], []>} : vector<8x32xf32>, vector<32x128xf32>, vector<8x128xf32> -> vector<8x128xf32>
    %272 = arith.addf %269, %271 : vector<8x128xf32>
    %273 = vector.broadcast %3 : vector<1x128xf32> to vector<8x128xf32>
    %274 = arith.addf %272, %273 : vector<8x128xf32>
    %cst_48 = arith.constant dense<0.000000e+00> : vector<8x128xf32>
    %275 = tpu.matmul %274, %261, %cst_48 {dimension_numbers = #tpu.dot_dimension_numbers<[1], [0], [0], [1], [0, 0, 1, 1], [], []>} : vector<8x128xf32>, vector<128x128xf32>, vector<8x128xf32> -> vector<8x128xf32>
    %276 = vector.broadcast %4 : vector<1x128xf32> to vector<8x128xf32>
    %277 = arith.addf %275, %276 : vector<8x128xf32>
    %c0_49 = arith.constant 0 : index
    %c0_50 = arith.constant 0 : index
    %278 = vector.load %arg7[%c0_49, %c0_50] : memref<8x128xf32, #tpu.memory_space<vmem>>, vector<8x128xf32>
    tpu.vector_store %arg7[%c0_49, %c0_50], %277 {strides = array<i32>} : memref<8x128xf32, #tpu.memory_space<vmem>>, vector<8x128xf32>,
    return
  }
}

</mosaic_0001>

<llo_original>
// kernel: _lambda_.1
$region0: #{_lambda_.1}
  #allocation0 [shape = 'u32[]', space=smem, size = 0x4, offset = 0x4, fixed_abs, tag = 'smem constant byte address 0x4 - core index']
  #allocation1 [shape = 'u32[72,128]{1,0:T(1,128)}', space=vmem, size = 0x9000, scoped, tag = 'internal scratch']
  %s0 = inlined_call_operand.vmem [shape: s32[4], index: 0, kind: input, shape index: {}]
  %s1 = inlined_call_operand.vmem [shape: s32[4], index: 1, kind: input, shape index: {}]
  %s2 = inlined_call_operand.hbm [shape: f32[32,32], index: 2, kind: input, shape index: {}]
  %s3 = inlined_call_operand.hbm [shape: f32[32,32], index: 3, kind: input, shape index: {}]
  %s4 = inlined_call_operand.hbm [shape: bf16[64,128], index: 4, kind: input, shape index: {}]
  %s5 = inlined_call_operand.hbm [shape: f32[256,128], index: 5, kind: input, shape index: {}]
  %s6 = inlined_call_operand.hbm [shape: f32[8,128], index: 6, kind: input, shape index: {}]
  %s7 = inlined_call_operand.vmem [shape: f32[8,128], index: 7, kind: output, shape index: {}]
  %s8 = sld [smem:[#allocation0]]
  $region66: #{_lambda_.1} parent=0
    _
  %s10 = ssub.s32 1, %s8
  %s11 = scalar_select 0, %s10, %s8
  $region1: #{_lambda_.1} parent=0
    #allocation2 [shape = 'u8[512]{0}', space=smem, size = 0x200, scoped, tag = 'input window, operand 0, single buffered']
    #allocation3 [shape = 's32[1]{0}', space=sflag, size = 0x4, scoped, tag = 'scoped memory for _lambda_.1']
    #allocation4 [shape = 's32[1]{0}', space=sflag, size = 0x4, scoped, tag = 'scoped memory for _lambda_.1']
    #allocation5 [shape = 'u8[512]{0}', space=smem, size = 0x200, scoped, tag = 'input window, operand 1, single buffered']
    #allocation6 [shape = 's32[1]{0}', space=sflag, size = 0x4, scoped, tag = 'scoped memory for _lambda_.1']
    #allocation7 [shape = 'u8[16384]{0}', space=vmem, size = 0x4000, scoped, tag = 'input window, operand 2, single buffered']
    #allocation8 [shape = 'u8[16384]{0}', space=vmem, size = 0x4000, scoped, tag = 'input window, operand 3, single buffered']
    #allocation9 [shape = 's32[1]{0}', space=sflag, size = 0x4, scoped, tag = 'scoped memory for _lambda_.1']
    #allocation10 [shape = 'u8[16384]{0}', space=vmem, size = 0x4000, scoped, tag = 'input window, operand 4, single buffered']
    #allocation11 [shape = 'u8[131072]{0}', space=vmem, size = 0x20000, scoped, tag = 'input window, operand 5, single buffered']
    #allocation12 [shape = 's32[1]{0}', space=sflag, size = 0x4, scoped, tag = 'scoped memory for _lambda_.1']
    #allocation13 [shape = 'u8[4096]{0}', space=vmem, size = 0x1000, scoped, tag = 'input window, operand 6, single buffered']
    %12 = vsyncpa [#allocation4], 0
    %13 = vsyncpa [#allocation6], 0
    %14 = vsyncpa [#allocation3], 0
    %15 = vsyncpa [#allocation9], 0
    %16 = vsyncpa [#allocation12], 0
    // Predicated region
    $region2: #{_lambda_.1} parent=1 // pred_check
      _
    $region3: #{_lambda_.1} parent=1 // pred_check_branch
      %18 = sbr.rel (0) target = $region5
    $region4: #{_lambda_.1} parent=1 // pred_region
      %20 = vsyncadd [#allocation4], 0
      %s22 = sshll.u32 %s0, 4
      %s23 = int_to_ptr.vmem [resolvable:$true] %s22
      %25 = dma.vmem_to_smem %s23, 16, [#allocation2], [#allocation4]
    $region5: #{_lambda_.1} parent=1 // pred_fallthru
      _
    // Predicated region
    $region6: #{_lambda_.1} parent=1 // pred_check
      _
    $region7: #{_lambda_.1} parent=1 // pred_check_branch
      %27 = sbr.rel (0) target = $region9
    $region8: #{_lambda_.1} parent=1 // pred_region
      %29 = vsyncadd [#allocation6], 0
      %s31 = sshll.u32 %s1, 4
      %s32 = int_to_ptr.vmem [resolvable:$true] %s31
      %34 = dma.vmem_to_smem %s32, 16, [#allocation5], [#allocation6]
    $region9: #{_lambda_.1} parent=1 // pred_fallthru
      _
    // Predicated region
    $region10: #{_lambda_.1} parent=1 // pred_check
      _
    $region11: #{_lambda_.1} parent=1 // pred_check_branch
      %36 = sbr.rel (0) target = $region13
    $region12: #{_lambda_.1} parent=1 // pred_region
      %38 = vsyncadd [#allocation3], 0
      %s39 = sshll.u32 %s2, 4
      %s40 = int_to_ptr.hbm [resolvable:$true] %s39
      %s41 = sshll.u32 [#allocation7], 4
      %s42 = int_to_ptr.vmem [resolvable:$true] %s41
      %47 = dma.hbm_to_vmem [thread:$0]  %s40, 512, %s42, [#allocation3], 128, 128, 8
    $region13: #{_lambda_.1} parent=1 // pred_fallthru
      _
    // Predicated region
    $region14: #{_lambda_.1} parent=1 // pred_check
      _
    $region15: #{_lambda_.1} parent=1 // pred_check_branch
      %49 = sbr.rel (0) target = $region17
    $region16: #{_lambda_.1} parent=1 // pred_region
      %51 = vsyncadd [#allocation9], 0
      %s52 = sshll.u32 %s3, 4
      %s53 = int_to_ptr.hbm [resolvable:$true] %s52
      %s54 = sshll.u32 [#allocation8], 4
      %s55 = int_to_ptr.vmem [resolvable:$true] %s54
      %60 = dma.hbm_to_vmem [thread:$0]  %s53, 512, %s55, [#allocation9], 128, 128, 8
    $region17: #{_lambda_.1} parent=1 // pred_fallthru
      _
    // Predicated region
    $region18: #{_lambda_.1} parent=1 // pred_check
      _
    $region19: #{_lambda_.1} parent=1 // pred_check_branch
      %62 = sbr.rel (0) target = $region21
    $region20: #{_lambda_.1} parent=1 // pred_region
      %64 = vsyncadd [#allocation9], 0
      %s65 = sshll.u32 %s4, 4
      %s66 = int_to_ptr.hbm [resolvable:$true] %s65
      %s67 = sshll.u32 [#allocation10], 4
      %s68 = int_to_ptr.vmem [resolvable:$true] %s67
      %73 = dma.hbm_to_vmem [thread:$0]  %s66, 512, %s68, [#allocation9], 64, 64, 4
    $region21: #{_lambda_.1} parent=1 // pred_fallthru
      _
    // Predicated region
    $region22: #{_lambda_.1} parent=1 // pred_check
      _
    $region23: #{_lambda_.1} parent=1 // pred_check_branch
      %75 = sbr.rel (0) target = $region25
    $region24: #{_lambda_.1} parent=1 // pred_region
      %77 = vsyncadd [#allocation12], 0
      %s78 = sshll.u32 %s5, 4
      %s79 = int_to_ptr.hbm [resolvable:$true] %s78
      %s80 = sshll.u32 [#allocation11], 4
      %s81 = int_to_ptr.vmem [resolvable:$true] %s80
      %86 = dma.hbm_to_vmem [thread:$0]  %s79, 4096, %s81, [#allocation12], 128, 128, 8
    $region25: #{_lambda_.1} parent=1 // pred_fallthru
      _
    // Predicated region
    $region26: #{_lambda_.1} parent=1 // pred_check
      _
    $region27: #{_lambda_.1} parent=1 // pred_check_branch
      %88 = sbr.rel (0) target = $region29
    $region28: #{_lambda_.1} parent=1 // pred_region
      %90 = vsyncadd [#allocation12], 0
      %s92 = sshll.u32 %s6, 4
      %s93 = int_to_ptr.hbm [resolvable:$true] %s92
      %s94 = sshll.u32 [#allocation13], 4
      %s95 = int_to_ptr.vmem [resolvable:$true] %s94
      %97 = dma.hbm_to_vmem [thread:$0]  %s93, 128, %s95, [#allocation12]
    $region29: #{_lambda_.1} parent=1 // pred_fallthru
      _
    // Predicated region
    $region30: #{_lambda_.1} parent=1 // pred_check
      _
    $region31: #{_lambda_.1} parent=1 // pred_check_branch
      %99 = sbr.rel (0) target = $region33
    $region32: #{_lambda_.1} parent=1 // pred_region
      %101 = dma.done [#allocation4], 16
    $region33: #{_lambda_.1} parent=1 // pred_fallthru
      _
    // Predicated region
    $region34: #{_lambda_.1} parent=1 // pred_check
      _
    $region35: #{_lambda_.1} parent=1 // pred_check_branch
      %103 = sbr.rel (0) target = $region37
    $region36: #{_lambda_.1} parent=1 // pred_region
      %105 = dma.done [#allocation6], 16
    $region37: #{_lambda_.1} parent=1 // pred_fallthru
      _
    // Predicated region
    $region38: #{_lambda_.1} parent=1 // pred_check
      _
    $region39: #{_lambda_.1} parent=1 // pred_check_branch
      %107 = sbr.rel (0) target = $region41
    $region40: #{_lambda_.1} parent=1 // pred_region
      %109 = dma.done [#allocation3], 512
    $region41: #{_lambda_.1} parent=1 // pred_fallthru
      _
    // Predicated region
    $region42: #{_lambda_.1} parent=1 // pred_check
      _
    $region43: #{_lambda_.1} parent=1 // pred_check_branch
      %111 = sbr.rel (0) target = $region45
    $region44: #{_lambda_.1} parent=1 // pred_region
      %113 = dma.done [#allocation9], 512
    $region45: #{_lambda_.1} parent=1 // pred_fallthru
      _
    // Predicated region
    $region46: #{_lambda_.1} parent=1 // pred_check
      _
    $region47: #{_lambda_.1} parent=1 // pred_check_branch
      %115 = sbr.rel (0) target = $region49
    $region48: #{_lambda_.1} parent=1 // pred_region
      %117 = dma.done [#allocation9], 512
    $region49: #{_lambda_.1} parent=1 // pred_fallthru
      _
    // Predicated region
    $region50: #{_lambda_.1} parent=1 // pred_check
      _
    $region51: #{_lambda_.1} parent=1 // pred_check_branch
      %119 = sbr.rel (0) target = $region53
    $region52: #{_lambda_.1} parent=1 // pred_region
      %121 = dma.done [#allocation12], 4096
    $region53: #{_lambda_.1} parent=1 // pred_fallthru
      _
    // Predicated region
    $region54: #{_lambda_.1} parent=1 // pred_check
      _
    $region55: #{_lambda_.1} parent=1 // pred_check_branch
      %123 = sbr.rel (0) target = $region57
    $region56: #{_lambda_.1} parent=1 // pred_region
      %125 = dma.done [#allocation12], 128
    $region57: #{_lambda_.1} parent=1 // pred_fallthru
      _
    %126 = sfence
    %v128 = vld [vmem:[#allocation10] sm:$0xf]
    %v129 = vld [vmem:[#allocation10 + $0x4] sm:$0xf]
    %v130 = vld [vmem:[#allocation10 + $0x8] sm:$0xf]
    %v131 = vld [vmem:[#allocation10 + $0xc] sm:$0xf]
    %v132 = vld [vmem:[#allocation10 + $0x10] sm:$0xf]
    %v133 = vld [vmem:[#allocation10 + $0x14] sm:$0xf]
    %v134 = vld [vmem:[#allocation10 + $0x18] sm:$0xf]
    %v135 = vld [vmem:[#allocation10 + $0x1c] sm:$0xf]
    %v136 = vld [vmem:[#allocation13] sm:$0x1]
    %v137 = vld [vmem:[#allocation13 + $0x1] sm:$0x1]
    %v138 = vld [vmem:[#allocation13 + $0x2] sm:$0x1]
    %v139 = vlaneseq
    %v140 = vand.u32 %v139, 127
    %vm141 = vcmp.ge.s32.totalorder %v140, 64
    %vm142 = vcmp.lt.s32.totalorder %v140, 96
    %vm143 = vmand %vm141, %vm142
    %v144 = vsel %vm143, 1.0, 0.5
    %v145 = vsel %vm143, 0.0, 0.5
    %v146 = vlaneseq
    %v147 = vshrl.u32 %v146, 7
    %vm148 = vcmp.eq.s32.totalorder %v147, 0
    %s149 = sld [smem:[#allocation2]]
    %v150 = vstv %s149
    %v151 = vsel %vm148, %v150, 0
    %vm152 = vcmp.eq.s32.totalorder %v147, 4
    %s153 = sld [smem:[#allocation5]]
    %v154 = vstv %s153
    %v155 = vsel %vm152, %v154, %v151
    %vm156 = vcmp.eq.s32.totalorder %v147, 1
    %s157 = sld [smem:[#allocation2 + $0x1]]
    %v158 = vstv %s157
    %v159 = vsel %vm156, %v158, %v155
    %vm160 = vcmp.eq.s32.totalorder %v147, 5
    %s161 = sld [smem:[#allocation5 + $0x1]]
    %v162 = vstv %s161
    %v163 = vsel %vm160, %v162, %v159
    %vm164 = vcmp.eq.s32.totalorder %v147, 2
    %s165 = sld [smem:[#allocation2 + $0x2]]
    %v166 = vstv %s165
    %v167 = vsel %vm164, %v166, %v163
    %vm168 = vcmp.eq.s32.totalorder %v147, 6
    %s169 = sld [smem:[#allocation5 + $0x2]]
    %v170 = vstv %s169
    %v171 = vsel %vm168, %v170, %v167
    %vm172 = vcmp.eq.s32.totalorder %v147, 3
    %s173 = sld [smem:[#allocation2 + $0x3]]
    %v174 = vstv %s173
    %v175 = vsel %vm172, %v174, %v171
    %vm176 = vcmp.eq.s32.totalorder %v147, 7
    %s177 = sld [smem:[#allocation5 + $0x3]]
    %v178 = vstv %s177
    %v179 = vsel %vm176, %v178, %v175
    %v180 = vld [vmem:[#allocation7] sm:$0xff]
    %v181 = vld [vmem:[#allocation7 + $0x8] sm:$0xff]
    %v182 = vld [vmem:[#allocation7 + $0x10] sm:$0xff]
    %v183 = vld [vmem:[#allocation7 + $0x18] sm:$0xff]
    %v184 = vpack.c.bf16 %v181, %v180
    %v185 = vpack.c.bf16 %v183, %v182
    %v186 = vperm.slane %v136, 0
    %v191 = vunpack.c.l.b16 %v128
    %v192 = vunpack.c.l.b16 %v129
    %v193 = vunpack.c.l.b16 %v130
    %v194 = vunpack.c.l.b16 %v131
    %v195 = vpack.c.b16 %v192, %v191
    %v196 = vpack.c.b16 %v194, %v193
    %vm199 = vcmask 261120
    %v201 = vsel %vm199, %v184, 0
    %v204 = vsel %vm199, %v185, 0
    %206 = vmatpush.bf16.msra.mxu0 0
    %207 = vmatpush.bf16.msra.mxu0 0
    %208 = vmatpush.bf16.msra.mxu0 0
    %209 = vmatpush.bf16.msra.mxu0 0
    %210 = vmatpush.bf16.msra.mxu0 0
    %211 = vmatpush.bf16.msra.mxu0 0
    %212 = vmatpush.bf16.msra.mxu0 %v196
    %213 = vmatpush.bf16.msra.mxu0 %v195
    %214 = vmatmul.bf16.gmra.mxu0 %v201
    %v215 = vpop.f32.mrf.mxu0
    %v216 = vadd.f32 %v186, %v215
    %v217 = vpop.f32.mrf.mxu0
    %v218 = vadd.f32 %v186, %v217
    %219 = vmatmul.bf16.gmra.mxu0 %v204
    %v220 = vpop.f32.mrf.mxu0
    %v221 = vadd.f32 %v186, %v220
    %v222 = vpop.f32.mrf.mxu0
    %v223 = vadd.f32 %v186, %v222
    %224 = vdwg.mxu0
    %v225 = vld [vmem:[#allocation8] sm:$0xff]
    %v226 = vld [vmem:[#allocation8 + $0x8] sm:$0xff]
    %v227 = vld [vmem:[#allocation8 + $0x10] sm:$0xff]
    %v228 = vld [vmem:[#allocation8 + $0x18] sm:$0xff]
    %v229 = vpack.c.bf16 %v226, %v225
    %v230 = vpack.c.bf16 %v228, %v227
    %v232 = vsel %vm199, %v229, 0
    %v235 = vsel %vm199, %v230, 0
    %237 = vmatpush.bf16.msra.mxu0 0
    %238 = vmatpush.bf16.msra.mxu0 0
    %239 = vmatpush.bf16.msra.mxu0 0
    %240 = vmatpush.bf16.msra.mxu0 0
    %241 = vmatpush.bf16.msra.mxu0 0
    %242 = vmatpush.bf16.msra.mxu0 0
    %243 = vmatpush.bf16.msra.mxu0 %v196
    %244 = vmatpush.bf16.msra.mxu0 %v195
    %245 = vmatmul.bf16.gmra.mxu0 %v232
    %v246 = vpop.f32.mrf.mxu0
    %v247 = vadd.f32 %v186, %v246
    %v248 = vpop.f32.mrf.mxu0
    %v249 = vadd.f32 %v186, %v248
    %250 = vmatmul.bf16.gmra.mxu0 %v235
    %v251 = vpop.f32.mrf.mxu0
    %v252 = vadd.f32 %v186, %v251
    %v253 = vpop.f32.mrf.mxu0
    %v254 = vadd.f32 %v186, %v253
    %255 = vdwg.mxu0
    %v257 = vrot.slane %v247, 4
    %vm259 = vcmask 1043456
    %v260 = vsel %vm259, %v216, %v257
    %v265 = vunpack.c.l.b16 %v132
    %v266 = vunpack.c.l.b16 %v133
    %v267 = vunpack.c.l.b16 %v134
    %v268 = vunpack.c.l.b16 %v135
    %v269 = vpack.c.b16 %v266, %v265
    %v270 = vpack.c.b16 %v268, %v267
    %v274 = vsel %vm199, 0, 0
    %276 = vmatpush.bf16.msra.mxu0 0
    %277 = vmatpush.bf16.msra.mxu0 0
    %278 = vmatpush.bf16.msra.mxu0 0
    %279 = vmatpush.bf16.msra.mxu0 0
    %280 = vmatpush.bf16.msra.mxu0 0
    %281 = vmatpush.bf16.msra.mxu0 0
    %282 = vmatpush.bf16.msra.mxu0 %v270
    %283 = vmatpush.bf16.msra.mxu0 %v269
    %284 = vmatmul.bf16.gmra.mxu0 %v274
    %v285 = vpop.f32.mrf.mxu0
    %v286 = vadd.f32 0.0, %v285
    %v287 = vpop.f32.mrf.mxu0
    %288 = vdwg.mxu0
    %v289 = vadd.f32 %v260, %v286
    %v290 = vmul.f32 %v289, %v144
    %v291 = vtanh.pop %v290
    %v292 = vmul.f32 %v291, %v144
    %v293 = vadd.f32 %v292, %v145
    %v294 = vmul.f32 %v293, 0.0
    %296 = vrot.lane.b32.xlu0 %v293, 64
    %v297 = vpop.permute.xlu0 %296
    %v299 = vmul.f32 %v293, %v297
    %301 = vrot.lane.b32.xlu0 %v299, 32
    %v302 = vpop.permute.xlu0 %301
    %v304 = vadd.f32 %v294, %v302
    %v305 = vtanh.pop %v304
    %307 = vrot.lane.b32.xlu0 %v305, 64
    %v308 = vpop.permute.xlu0 %307
    %v310 = vmul.f32 %v293, %v308
    %vm311 = vcmp.gt.s32.totalorder %v179, 0
    %v312 = vsel %vm311, %v304, 0.0
    %v313 = vsel %vm311, %v310, 0.0
    %v315 = vrot.slane %v216, 4
    %v317 = vsel %vm259, %v315, %v247
    %v318 = vpack.c.bf16 %v313, %v313
    %320 = vrot.lane.b32.xlu0 %v318, 32
    %v321 = vpop.permute.xlu0 %320
    %v323 = vsel %vm199, %v321, 0
    %325 = vmatpush.bf16.msra.mxu0 0
    %326 = vmatpush.bf16.msra.mxu0 0
    %327 = vmatpush.bf16.msra.mxu0 0
    %328 = vmatpush.bf16.msra.mxu0 0
    %329 = vmatpush.bf16.msra.mxu0 0
    %330 = vmatpush.bf16.msra.mxu0 0
    %331 = vmatpush.bf16.msra.mxu0 %v270
    %332 = vmatpush.bf16.msra.mxu0 %v269
    %333 = vmatmul.bf16.gmra.mxu0 %v323
    %v334 = vpop.f32.mrf.mxu0
    %v335 = vadd.f32 0.0, %v334
    %v336 = vpop.f32.mrf.mxu0
    %337 = vdwg.mxu0
    %v338 = vadd.f32 %v317, %v335
    %v339 = vmul.f32 %v338, %v144
    %v340 = vtanh.pop %v339
    %v341 = vmul.f32 %v340, %v144
    %v342 = vadd.f32 %v341, %v145
    %v343 = vmul.f32 %v342, %v312
    %345 = vrot.lane.b32.xlu0 %v342, 64
    %v346 = vpop.permute.xlu0 %345
    %v348 = vmul.f32 %v342, %v346
    %350 = vrot.lane.b32.xlu0 %v348, 32
    %v351 = vpop.permute.xlu0 %350
    %v353 = vadd.f32 %v343, %v351
    %v354 = vtanh.pop %v353
    %356 = vrot.lane.b32.xlu0 %v354, 64
    %v357 = vpop.permute.xlu0 %356
    %v359 = vmul.f32 %v342, %v357
    %vm360 = vcmp.gt.s32.totalorder %v179, 1
    %v361 = vsel %vm360, %v353, %v312
    %v362 = vsel %vm360, %v359, %v313
    %v364 = vrot.slane %v249, 4
    %v366 = vsel %vm259, %v218, %v364
    %v367 = vpack.c.bf16 %v362, %v362
    %369 = vrot.lane.b32.xlu0 %v367, 32
    %v370 = vpop.permute.xlu0 %369
    %v372 = vsel %vm199, %v370, 0
    %374 = vmatpush.bf16.msra.mxu0 0
    %375 = vmatpush.bf16.msra.mxu0 0
    %376 = vmatpush.bf16.msra.mxu0 0
    %377 = vmatpush.bf16.msra.mxu0 0
    %378 = vmatpush.bf16.msra.mxu0 0
    %379 = vmatpush.bf16.msra.mxu0 0
    %380 = vmatpush.bf16.msra.mxu0 %v270
    %381 = vmatpush.bf16.msra.mxu0 %v269
    %382 = vmatmul.bf16.gmra.mxu0 %v372
    %v383 = vpop.f32.mrf.mxu0
    %v384 = vadd.f32 0.0, %v383
    %v385 = vpop.f32.mrf.mxu0
    %386 = vdwg.mxu0
    %v387 = vadd.f32 %v366, %v384
    %v388 = vmul.f32 %v387, %v144
    %v389 = vtanh.pop %v388
    %v390 = vmul.f32 %v389, %v144
    %v391 = vadd.f32 %v390, %v145
    %v392 = vmul.f32 %v391, %v361
    %394 = vrot.lane.b32.xlu0 %v391, 64
    %v395 = vpop.permute.xlu0 %394
    %v397 = vmul.f32 %v391, %v395
    %399 = vrot.lane.b32.xlu0 %v397, 32
    %v400 = vpop.permute.xlu0 %399
    %v402 = vadd.f32 %v392, %v400
    %v403 = vtanh.pop %v402
    %405 = vrot.lane.b32.xlu0 %v403, 64
    %v406 = vpop.permute.xlu0 %405
    %v408 = vmul.f32 %v391, %v406
    %vm409 = vcmp.gt.s32.totalorder %v179, 2
    %v410 = vsel %vm409, %v402, %v361
    %v411 = vsel %vm409, %v408, %v362
    %v413 = vrot.slane %v218, 4
    %v415 = vsel %vm259, %v413, %v249
    %v416 = vpack.c.bf16 %v411, %v411
    %418 = vrot.lane.b32.xlu0 %v416, 32
    %v419 = vpop.permute.xlu0 %418
    %v421 = vsel %vm199, %v419, 0
    %423 = vmatpush.bf16.msra.mxu0 0
    %424 = vmatpush.bf16.msra.mxu0 0
    %425 = vmatpush.bf16.msra.mxu0 0
    %426 = vmatpush.bf16.msra.mxu0 0
    %427 = vmatpush.bf16.msra.mxu0 0
    %428 = vmatpush.bf16.msra.mxu0 0
    %429 = vmatpush.bf16.msra.mxu0 %v270
    %430 = vmatpush.bf16.msra.mxu0 %v269
    %431 = vmatmul.bf16.gmra.mxu0 %v421
    %v432 = vpop.f32.mrf.mxu0
    %v433 = vadd.f32 0.0, %v432
    %v434 = vpop.f32.mrf.mxu0
    %435 = vdwg.mxu0
    %v436 = vadd.f32 %v415, %v433
    %v437 = vmul.f32 %v436, %v144
    %v438 = vtanh.pop %v437
    %v439 = vmul.f32 %v438, %v144
    %v440 = vadd.f32 %v439, %v145
    %v441 = vmul.f32 %v440, %v410
    %443 = vrot.lane.b32.xlu0 %v440, 64
    %v444 = vpop.permute.xlu0 %443
    %v446 = vmul.f32 %v440, %v444
    %448 = vrot.lane.b32.xlu0 %v446, 32
    %v449 = vpop.permute.xlu0 %448
    %v451 = vadd.f32 %v441, %v449
    %v452 = vtanh.pop %v451
    %454 = vrot.lane.b32.xlu0 %v452, 64
    %v455 = vpop.permute.xlu0 %454
    %v457 = vmul.f32 %v440, %v455
    %vm458 = vcmp.gt.s32.totalorder %v179, 3
    %v459 = vsel %vm458, %v451, %v410
    %v460 = vsel %vm458, %v457, %v411
    %v462 = vrot.slane %v252, 4
    %v464 = vsel %vm259, %v221, %v462
    %v465 = vpack.c.bf16 %v460, %v460
    %467 = vrot.lane.b32.xlu0 %v465, 32
    %v468 = vpop.permute.xlu0 %467
    %v470 = vsel %vm199, %v468, 0
    %472 = vmatpush.bf16.msra.mxu0 0
    %473 = vmatpush.bf16.msra.mxu0 0
    %474 = vmatpush.bf16.msra.mxu0 0
    %475 = vmatpush.bf16.msra.mxu0 0
    %476 = vmatpush.bf16.msra.mxu0 0
    %477 = vmatpush.bf16.msra.mxu0 0
    %478 = vmatpush.bf16.msra.mxu0 %v270
    %479 = vmatpush.bf16.msra.mxu0 %v269
    %480 = vmatmul.bf16.gmra.mxu0 %v470
    %v481 = vpop.f32.mrf.mxu0
    %v482 = vadd.f32 0.0, %v481
    %v483 = vpop.f32.mrf.mxu0
    %484 = vdwg.mxu0
    %v485 = vadd.f32 %v464, %v482
    %v486 = vmul.f32 %v485, %v144
    %v487 = vtanh.pop %v486
    %v488 = vmul.f32 %v487, %v144
    %v489 = vadd.f32 %v488, %v145
    %v490 = vmul.f32 %v489, %v459
    %492 = vrot.lane.b32.xlu0 %v489, 64
    %v493 = vpop.permute.xlu0 %492
    %v495 = vmul.f32 %v489, %v493
    %497 = vrot.lane.b32.xlu0 %v495, 32
    %v498 = vpop.permute.xlu0 %497
    %v500 = vadd.f32 %v490, %v498
    %v501 = vtanh.pop %v500
    %503 = vrot.lane.b32.xlu0 %v501, 64
    %v504 = vpop.permute.xlu0 %503
    %v506 = vmul.f32 %v489, %v504
    %vm507 = vcmp.gt.s32.totalorder %v179, 4
    %v508 = vsel %vm507, %v500, %v459
    %v509 = vsel %vm507, %v506, %v460
    %v511 = vrot.slane %v221, 4
    %v513 = vsel %vm259, %v511, %v252
    %v514 = vpack.c.bf16 %v509, %v509
    %516 = vrot.lane.b32.xlu0 %v514, 32
    %v517 = vpop.permute.xlu0 %516
    %v519 = vsel %vm199, %v517, 0
    %521 = vmatpush.bf16.msra.mxu0 0
    %522 = vmatpush.bf16.msra.mxu0 0
    %523 = vmatpush.bf16.msra.mxu0 0
    %524 = vmatpush.bf16.msra.mxu0 0
    %525 = vmatpush.bf16.msra.mxu0 0
    %526 = vmatpush.bf16.msra.mxu0 0
    %527 = vmatpush.bf16.msra.mxu0 %v270
    %528 = vmatpush.bf16.msra.mxu0 %v269
    %529 = vmatmul.bf16.gmra.mxu0 %v519
    %v530 = vpop.f32.mrf.mxu0
    %v531 = vadd.f32 0.0, %v530
    %v532 = vpop.f32.mrf.mxu0
    %533 = vdwg.mxu0
    %v534 = vadd.f32 %v513, %v531
    %v535 = vmul.f32 %v534, %v144
    %v536 = vtanh.pop %v535
    %v537 = vmul.f32 %v536, %v144
    %v538 = vadd.f32 %v537, %v145
    %v539 = vmul.f32 %v538, %v508
    %541 = vrot.lane.b32.xlu0 %v538, 64
    %v542 = vpop.permute.xlu0 %541
    %v544 = vmul.f32 %v538, %v542
    %546 = vrot.lane.b32.xlu0 %v544, 32
    %v547 = vpop.permute.xlu0 %546
    %v549 = vadd.f32 %v539, %v547
    %v550 = vtanh.pop %v549
    %552 = vrot.lane.b32.xlu0 %v550, 64
    %v553 = vpop.permute.xlu0 %552
    %v555 = vmul.f32 %v538, %v553
    %vm556 = vcmp.gt.s32.totalorder %v179, 5
    %v557 = vsel %vm556, %v549, %v508
    %v558 = vsel %vm556, %v555, %v509
    %v560 = vrot.slane %v254, 4
    %v562 = vsel %vm259, %v223, %v560
    %v563 = vpack.c.bf16 %v558, %v558
    %565 = vrot.lane.b32.xlu0 %v563, 32
    %v566 = vpop.permute.xlu0 %565
    %v568 = vsel %vm199, %v566, 0
    %570 = vmatpush.bf16.msra.mxu0 0
    %571 = vmatpush.bf16.msra.mxu0 0
    %572 = vmatpush.bf16.msra.mxu0 0
    %573 = vmatpush.bf16.msra.mxu0 0
    %574 = vmatpush.bf16.msra.mxu0 0
    %575 = vmatpush.bf16.msra.mxu0 0
    %576 = vmatpush.bf16.msra.mxu0 %v270
    %577 = vmatpush.bf16.msra.mxu0 %v269
    %578 = vmatmul.bf16.gmra.mxu0 %v568
    %v579 = vpop.f32.mrf.mxu0
    %v580 = vadd.f32 0.0, %v579
    %v581 = vpop.f32.mrf.mxu0
    %582 = vdwg.mxu0
    %v583 = vadd.f32 %v562, %v580
    %v584 = vmul.f32 %v583, %v144
    %v585 = vtanh.pop %v584
    %v586 = vmul.f32 %v585, %v144
    %v587 = vadd.f32 %v586, %v145
    %v588 = vmul.f32 %v587, %v557
    %590 = vrot.lane.b32.xlu0 %v587, 64
    %v591 = vpop.permute.xlu0 %590
    %v593 = vmul.f32 %v587, %v591
    %595 = vrot.lane.b32.xlu0 %v593, 32
    %v596 = vpop.permute.xlu0 %595
    %v598 = vadd.f32 %v588, %v596
    %v599 = vtanh.pop %v598
    %601 = vrot.lane.b32.xlu0 %v599, 64
    %v602 = vpop.permute.xlu0 %601
    %v604 = vmul.f32 %v587, %v602
    %vm605 = vcmp.gt.s32.totalorder %v179, 6
    %v606 = vsel %vm605, %v598, %v557
    %v607 = vsel %vm605, %v604, %v558
    %v609 = vrot.slane %v223, 4
    %v611 = vsel %vm259, %v609, %v254
    %v612 = vpack.c.bf16 %v607, %v607
    %614 = vrot.lane.b32.xlu0 %v612, 32
    %v615 = vpop.permute.xlu0 %614
    %v617 = vsel %vm199, %v615, 0
    %619 = vmatpush.bf16.msra.mxu0 0
    %620 = vmatpush.bf16.msra.mxu0 0
    %621 = vmatpush.bf16.msra.mxu0 0
    %622 = vmatpush.bf16.msra.mxu0 0
    %623 = vmatpush.bf16.msra.mxu0 0
    %624 = vmatpush.bf16.msra.mxu0 0
    %625 = vmatpush.bf16.msra.mxu0 %v270
    %626 = vmatpush.bf16.msra.mxu0 %v269
    %627 = vmatmul.bf16.gmra.mxu0 %v617
    %v628 = vpop.f32.mrf.mxu0
    %v629 = vadd.f32 0.0, %v628
    %v630 = vpop.f32.mrf.mxu0
    %631 = vdwg.mxu0
    %v632 = vadd.f32 %v611, %v629
    %v633 = vmul.f32 %v632, %v144
    %v634 = vtanh.pop %v633
    %v635 = vmul.f32 %v634, %v144
    %v636 = vadd.f32 %v635, %v145
    %v637 = vmul.f32 %v636, %v606
    %639 = vrot.lane.b32.xlu0 %v636, 64
    %v640 = vpop.permute.xlu0 %639
    %v642 = vmul.f32 %v636, %v640
    %644 = vrot.lane.b32.xlu0 %v642, 32
    %v645 = vpop.permute.xlu0 %644
    %v647 = vadd.f32 %v637, %v645
    %v648 = vtanh.pop %v647
    %650 = vrot.lane.b32.xlu0 %v648, 64
    %v651 = vpop.permute.xlu0 %650
    %v653 = vmul.f32 %v636, %v651
    %vm654 = vcmp.gt.s32.totalorder %v179, 7
    %v655 = vsel %vm654, %v653, %v607
    %v657 = vrot.slane %v655, 4
    %v659 = vsel %vm259, %v657, %v657
    %v660 = vsub.f32 %v655, %v659
    %v661 = vand.u32 2147483647, %v660
    %v662 = vmul.f32 %v655, %v659
    %v663 = vld [vmem:[#allocation11] sm:$0xff]
    %v664 = vld [vmem:[#allocation11 + $0x8] sm:$0xff]
    %v665 = vld [vmem:[#allocation11 + $0x10] sm:$0xff]
    %v666 = vld [vmem:[#allocation11 + $0x18] sm:$0xff]
    %v667 = vld [vmem:[#allocation11 + $0x20] sm:$0xff]
    %v668 = vld [vmem:[#allocation11 + $0x28] sm:$0xff]
    %v669 = vld [vmem:[#allocation11 + $0x30] sm:$0xff]
    %v670 = vld [vmem:[#allocation11 + $0x38] sm:$0xff]
    %v671 = vld [vmem:[#allocation11 + $0x40] sm:$0xff]
    %v672 = vld [vmem:[#allocation11 + $0x48] sm:$0xff]
    %v673 = vld [vmem:[#allocation11 + $0x50] sm:$0xff]
    %v674 = vld [vmem:[#allocation11 + $0x58] sm:$0xff]
    %v675 = vld [vmem:[#allocation11 + $0x60] sm:$0xff]
    %v676 = vld [vmem:[#allocation11 + $0x68] sm:$0xff]
    %v677 = vld [vmem:[#allocation11 + $0x70] sm:$0xff]
    %v678 = vld [vmem:[#allocation11 + $0x78] sm:$0xff]
    %v679 = vld [vmem:[#allocation11 + $0x80] sm:$0xff]
    %v680 = vld [vmem:[#allocation11 + $0x88] sm:$0xff]
    %v681 = vld [vmem:[#allocation11 + $0x90] sm:$0xff]
    %v682 = vld [vmem:[#allocation11 + $0x98] sm:$0xff]
    %v683 = vld [vmem:[#allocation11 + $0xa0] sm:$0xff]
    %v684 = vld [vmem:[#allocation11 + $0xa8] sm:$0xff]
    %v685 = vld [vmem:[#allocation11 + $0xb0] sm:$0xff]
    %v686 = vld [vmem:[#allocation11 + $0xb8] sm:$0xff]
    %v687 = vld [vmem:[#allocation11 + $0xc0] sm:$0xff]
    %v688 = vld [vmem:[#allocation11 + $0xc8] sm:$0xff]
    %v689 = vld [vmem:[#allocation11 + $0xd0] sm:$0xff]
    %v690 = vld [vmem:[#allocation11 + $0xd8] sm:$0xff]
    %v691 = vld [vmem:[#allocation11 + $0xe0] sm:$0xff]
    %v692 = vld [vmem:[#allocation11 + $0xe8] sm:$0xff]
    %v693 = vld [vmem:[#allocation11 + $0xf0] sm:$0xff]
    %v694 = vld [vmem:[#allocation11 + $0xf8] sm:$0xff]
    %696 = vrot.lane.b32.xlu0 %v659, 32
    %v697 = vpop.permute.xlu0 %696
    %v698 = vsel %vm199, %v697, 0
    %700 = vmatpush.msra.mxu0 0.0
    %701 = vmatpush.msra.mxu0 0.0
    %702 = vmatpush.msra.mxu0 0.0
    %703 = vmatpush.msra.mxu0 0.0
    %704 = vmatpush.msra.mxu0 0.0
    %705 = vmatpush.msra.mxu0 0.0
    %706 = vmatpush.msra.mxu0 0.0
    %707 = vmatpush.msra.mxu0 0.0
    %708 = vmatpush.msra.mxu0 0.0
    %709 = vmatpush.msra.mxu0 0.0
    %710 = vmatpush.msra.mxu0 0.0
    %711 = vmatpush.msra.mxu0 0.0
    %712 = vmatpush.msra.mxu0 %v670
    %713 = vmatpush.msra.mxu0 %v669
    %714 = vmatpush.msra.mxu0 %v668
    %715 = vmatpush.msra.mxu0 %v667
    %716 = vmatmul.f32.gmra.mxu0 %v698
    %v717 = vpop.f32.mrf.mxu0
    %v718 = vadd.f32 0.0, %v717
    %719 = vdwg.mxu0
    %720 = vrot.lane.b32.xlu0 %v655, 32
    %v721 = vpop.permute.xlu0 %720
    %v722 = vsel %vm199, %v721, 0
    %724 = vmatpush.msra.mxu0 0.0
    %725 = vmatpush.msra.mxu0 0.0
    %726 = vmatpush.msra.mxu0 0.0
    %727 = vmatpush.msra.mxu0 0.0
    %728 = vmatpush.msra.mxu0 0.0
    %729 = vmatpush.msra.mxu0 0.0
    %730 = vmatpush.msra.mxu0 0.0
    %731 = vmatpush.msra.mxu0 0.0
    %732 = vmatpush.msra.mxu0 0.0
    %733 = vmatpush.msra.mxu0 0.0
    %734 = vmatpush.msra.mxu0 0.0
    %735 = vmatpush.msra.mxu0 0.0
    %736 = vmatpush.msra.mxu0 %v666
    %737 = vmatpush.msra.mxu0 %v665
    %738 = vmatpush.msra.mxu0 %v664
    %739 = vmatpush.msra.mxu0 %v663
    %740 = vmatmul.f32.gmra.mxu0 %v722
    %v741 = vpop.f32.mrf.mxu0
    %v742 = vadd.f32 %v718, %v741
    %743 = vdwg.mxu0
    %745 = vrot.lane.b32.xlu0 %v661, 32
    %v746 = vpop.permute.xlu0 %745
    %v747 = vsel %vm199, %v746, 0
    %749 = vmatpush.msra.mxu0 0.0
    %750 = vmatpush.msra.mxu0 0.0
    %751 = vmatpush.msra.mxu0 0.0
    %752 = vmatpush.msra.mxu0 0.0
    %753 = vmatpush.msra.mxu0 0.0
    %754 = vmatpush.msra.mxu0 0.0
    %755 = vmatpush.msra.mxu0 0.0
    %756 = vmatpush.msra.mxu0 0.0
    %757 = vmatpush.msra.mxu0 0.0
    %758 = vmatpush.msra.mxu0 0.0
    %759 = vmatpush.msra.mxu0 0.0
    %760 = vmatpush.msra.mxu0 0.0
    %761 = vmatpush.msra.mxu0 %v674
    %762 = vmatpush.msra.mxu0 %v673
    %763 = vmatpush.msra.mxu0 %v672
    %764 = vmatpush.msra.mxu0 %v671
    %765 = vmatmul.f32.gmra.mxu0 %v747
    %v766 = vpop.f32.mrf.mxu0
    %v767 = vadd.f32 0.0, %v766
    %768 = vdwg.mxu0
    %v769 = vadd.f32 %v742, %v767
    %771 = vrot.lane.b32.xlu0 %v662, 32
    %v772 = vpop.permute.xlu0 %771
    %v773 = vsel %vm199, %v772, 0
    %775 = vmatpush.msra.mxu0 0.0
    %776 = vmatpush.msra.mxu0 0.0
    %777 = vmatpush.msra.mxu0 0.0
    %778 = vmatpush.msra.mxu0 0.0
    %779 = vmatpush.msra.mxu0 0.0
    %780 = vmatpush.msra.mxu0 0.0
    %781 = vmatpush.msra.mxu0 0.0
    %782 = vmatpush.msra.mxu0 0.0
    %783 = vmatpush.msra.mxu0 0.0
    %784 = vmatpush.msra.mxu0 0.0
    %785 = vmatpush.msra.mxu0 0.0
    %786 = vmatpush.msra.mxu0 0.0
    %787 = vmatpush.msra.mxu0 %v678
    %788 = vmatpush.msra.mxu0 %v677
    %789 = vmatpush.msra.mxu0 %v676
    %790 = vmatpush.msra.mxu0 %v675
    %791 = vmatmul.f32.gmra.mxu0 %v773
    %v792 = vpop.f32.mrf.mxu0
    %v793 = vadd.f32 0.0, %v792
    %794 = vdwg.mxu0
    %v795 = vadd.f32 %v769, %v793
    %v796 = vperm.slane %v137, 0
    %v797 = vadd.f32 %v795, %v796
    %v798 = vperm.slane %v138, 0
    %799 = vmatpush.msra.mxu0 %v694
    %800 = vmatpush.msra.mxu0 %v693
    %801 = vmatpush.msra.mxu0 %v692
    %802 = vmatpush.msra.mxu0 %v691
    %803 = vmatpush.msra.mxu0 %v690
    %804 = vmatpush.msra.mxu0 %v689
    %805 = vmatpush.msra.mxu0 %v688
    %806 = vmatpush.msra.mxu0 %v687
    %807 = vmatpush.msra.mxu0 %v686
    %808 = vmatpush.msra.mxu0 %v685
    %809 = vmatpush.msra.mxu0 %v684
    %810 = vmatpush.msra.mxu0 %v683
    %811 = vmatpush.msra.mxu0 %v682
    %812 = vmatpush.msra.mxu0 %v681
    %813 = vmatpush.msra.mxu0 %v680
    %814 = vmatpush.msra.mxu0 %v679
    %815 = vmatmul.f32.gmra.mxu0 %v797
    %v816 = vpop.f32.mrf.mxu0
    %v817 = vadd.f32 %v798, %v816
    %818 = vdwg.mxu0
    %819 = vst [vmem:[%s7] sm:$0xff] %v817
    // Predicated region
    $region58: #{_lambda_.1} parent=1 // pred_check
      _
    $region59: #{_lambda_.1} parent=1 // pred_check_branch
      %821 = sbr.rel (0) target = $region61
    $region60: #{_lambda_.1} parent=1 // pred_region
      _
    $region61: #{_lambda_.1} parent=1 // pred_fallthru
      _
    // Predicated region
    $region62: #{_lambda_.1} parent=1 // pred_check
      _
    $region63: #{_lambda_.1} parent=1 // pred_check_branch
      %823 = sbr.rel (0) target = $region65
    $region64: #{_lambda_.1} parent=1 // pred_region
      _
    $region65: #{_lambda_.1} parent=1 // pred_fallthru
      _
    %824 = vsyncpa [#allocation3], 1
    %825 = vsyncpa [#allocation9], 1
    %826 = vsyncpa [#allocation12], 1
    %827 = vsyncpa [#allocation4], 1
    %828 = vsyncpa [#allocation6], 1

</llo_original>
